<compile_context>
chip_gen: v7x
topology: tpu7x:2x2x1
jax: 0.10.0
libtpu: 0.0.40
codegen_flags: <defaults>
</compile_context>

<pallas_src>
import jax
import jax.numpy as jnp
from jax import lax
from jax.experimental import pallas as pl
from jax.experimental.pallas import tpu as pltpu

NUM_CLASSES = 12
BOX_DIM = 4
OUT = NUM_CLASSES + BOX_DIM  # 16
NEG_INF = -1e30  # sentinel kept in f32 (bf16 cannot represent it safely)


def _det_select_kernel(x_ref, wcls_ref, wbox_ref, bcls_ref, bbox_ref, mask_ref,
                       out_ref, best_score, best_box):
    # x_ref:     (1, C, THW)  bf16  one batch element, HW tile on the lane axis
    # wcls_ref:  (NC, C)      bf16  class head (pre-transposed)
    # wbox_ref:  (4, C)       bf16  box head (pre-transposed)
    # bcls_ref:  (NC, 1)      f32   class bias (scoring only)
    # bbox_ref:  (4, 1)       f32   box bias (added once to the chosen row)
    # mask_ref:  (1, NC, 1)   f32   multi-hot: classes named in the instruction
    # out_ref:   (1, 4, 1)    f32   box of the first best-scoring location
    # best_score: VMEM (1,1) f32; best_box: VMEM (4,1) f32  (online running best)
    t = pl.program_id(1)

    @pl.when(t == 0)
    def _():
        best_score[...] = jnp.full_like(best_score, NEG_INF)
        best_box[...] = jnp.zeros_like(best_box)

    x = x_ref[0]                                                  # (C, THW) bf16

    # MXU: N = THW fills the lanes; bf16 operands, f32 accumulation.
    cls = jnp.dot(wcls_ref[...], x,
                  preferred_element_type=jnp.float32) + bcls_ref[...]  # (NC, THW)
    box = jnp.dot(wbox_ref[...], x,
                  preferred_element_type=jnp.float32)                  # (4, THW)

    mask = mask_ref[0]                                            # (NC, 1)
    masked = jnp.where(mask > 0.0, cls, NEG_INF)                  # (NC, THW) f32
    score = jnp.max(masked, axis=0, keepdims=True)                # (1, THW)

    thw = score.shape[1]
    local_max = jnp.max(score, axis=1, keepdims=True)             # (1, 1)
    idx = lax.broadcasted_iota(jnp.int32, (1, thw), 1)            # (1, THW)
    # first lane attaining the local max ("first matching object" in the tile)
    first = jnp.min(jnp.where(score >= local_max, idx, thw),
                    axis=1, keepdims=True)                        # (1, 1)
    onehot = (idx == first).astype(jnp.float32)                   # (1, THW)

    # Gather only the 4 box values of the chosen location (one-hot reduce).
    local_box = jnp.sum(box * onehot, axis=1, keepdims=True)      # (4, 1)

    # Online running best across HW tiles; strict ">" keeps the FIRST match.
    better = local_max > best_score[...]                          # (1, 1) bool
    best_score[...] = jnp.where(better, local_max, best_score[...])
    best_box[...] = jnp.where(better, local_box, best_box[...])

    @pl.when(t == pl.num_programs(1) - 1)
    def _():
        out_ref[...] = (best_box[...] + bbox_ref[...])[None, :, :]


def _pick_hw_tile(hw):
    for t in (2048, 1024, 512, 256, 128):
        if hw % t == 0:
            return t
    return hw


def object_box_from_instruction(image_nchw, w, b, instr_mask, *, tile_hw=None):
    """Returns the (B, 4) box of the instruction-referenced object."""
    B, C, H, W = image_nchw.shape
    HW = H * W
    if tile_hw is None:
        tile_hw = _pick_hw_tile(HW)
    assert HW % tile_hw == 0, (HW, tile_hw)

    # NCHW -> (B, C, HW): pure reshape (no transpose); HW lands on the lanes.
    x = image_nchw.reshape(B, C, HW).astype(jnp.bfloat16)
    wt = jnp.transpose(w).astype(jnp.bfloat16)                    # (OUT, C), tiny
    wt_cls, wt_box = wt[:NUM_CLASSES], wt[NUM_CLASSES:]
    b_col = jnp.reshape(b, (OUT, 1)).astype(jnp.float32)
    b_cls, b_box = b_col[:NUM_CLASSES], b_col[NUM_CLASSES:]
    mask3 = instr_mask.reshape(B, NUM_CLASSES, 1).astype(jnp.float32)

    out = pl.pallas_call(
        _det_select_kernel,
        out_shape=jax.ShapeDtypeStruct((B, BOX_DIM, 1), jnp.float32),
        grid_spec=pltpu.PrefetchScalarGridSpec(
            num_scalar_prefetch=0,
            grid=(B, HW // tile_hw),
            in_specs=[
                pl.BlockSpec((1, C, tile_hw), lambda bi, ti: (bi, 0, ti)),
                pl.BlockSpec((NUM_CLASSES, C), lambda bi, ti: (0, 0)),
                pl.BlockSpec((BOX_DIM, C), lambda bi, ti: (0, 0)),
                pl.BlockSpec((NUM_CLASSES, 1), lambda bi, ti: (0, 0)),
                pl.BlockSpec((BOX_DIM, 1), lambda bi, ti: (0, 0)),
                pl.BlockSpec((1, NUM_CLASSES, 1), lambda bi, ti: (bi, 0, 0)),
            ],
            out_specs=pl.BlockSpec((1, BOX_DIM, 1), lambda bi, ti: (bi, 0, 0)),
            scratch_shapes=[
                pltpu.VMEM((1, 1), jnp.float32),        # running best score
                pltpu.VMEM((BOX_DIM, 1), jnp.float32),  # running best box
            ],
        ),
        compiler_params=pltpu.CompilerParams(
            dimension_semantics=("parallel", "arbitrary")),
    )(x, wt_cls, wt_box, b_cls, b_box, mask3)

    return out[:, :, 0]                                            # (B, 4)


def _reference(image_nchw, w, b, instr_mask):
    # Pure-JAX reference using the same bf16 operands / f32 accumulation.
    B, C, H, W = image_nchw.shape
    x = image_nchw.reshape(B, C, H * W).astype(jnp.bfloat16)
    wt = jnp.transpose(w).astype(jnp.bfloat16)                    # (OUT, C)
    logits = jnp.einsum("oc,bcn->bon", wt, x,
                        preferred_element_type=jnp.float32)
    logits = logits + b.reshape(1, OUT, 1).astype(jnp.float32)
    cls = logits[:, :NUM_CLASSES, :]
    masked = jnp.where(instr_mask[:, :, None] > 0, cls, NEG_INF)
    score = jnp.max(masked, axis=1)                               # (B, HW)
    first = jnp.argmax(score, axis=1)                             # first best match
    box = jnp.take_along_axis(logits[:, NUM_CLASSES:, :],
                              first[:, None, None], axis=2)[:, :, 0]
    return box                                                     # (B, 4)


if __name__ == "__main__":
    key = jax.random.PRNGKey(0)
    k_img, k_w, k_b = jax.random.split(key, 3)

    B, C, H, W = 2, 4, 16, 16
    image = jax.random.normal(k_img, (B, C, H, W), dtype=jnp.float32)

    # Deterministic synthetic detection-head parameters.
    w = jax.random.normal(k_w, (C, OUT), dtype=jnp.float32) * 0.1
    b = jax.random.normal(k_b, (1, OUT), dtype=jnp.float32) * 0.1

    # "Instruction" per batch element: which object class it mentions.
    # NOTE: like the original module, an instruction mentioning no known class
    # has no explicit "no match" signal (falls back to location 0).
    instr_class = jnp.array([3, 7], dtype=jnp.int32)
    instr_mask = jax.nn.one_hot(instr_class, NUM_CLASSES, dtype=jnp.float32)

    # tile_hw=128 exercises the multi-tile online running-best path (HW = 256).
    boxes = object_box_from_instruction(image, w, b, instr_mask, tile_hw=128)
    boxes = jax.block_until_ready(boxes)
    assert boxes.shape == (B, BOX_DIM) and boxes.dtype == jnp.float32

    ref = _reference(image, w, b, instr_mask)
    assert jnp.max(jnp.abs(boxes - ref)) < 5e-2, (boxes, ref)
    print("KERNEL_OK")
</pallas_src>

<mosaic_0001>
module attributes {stable_mosaic.version = 11 : i64} {
  func.func @_det_select_kernel(%arg0: i32, %arg1: i32, %arg2: memref<1x4x128xbf16, #tpu.memory_space<vmem>>, %arg3: memref<12x4xbf16, #tpu.memory_space<vmem>>, %arg4: memref<4x4xbf16, #tpu.memory_space<vmem>>, %arg5: memref<12x1xf32, #tpu.memory_space<vmem>>, %arg6: memref<4x1xf32, #tpu.memory_space<vmem>>, %arg7: memref<1x12x1xf32, #tpu.memory_space<vmem>>, %arg8: memref<1x4x1xf32, #tpu.memory_space<vmem>>, %arg9: memref<1x1xf32, #tpu.memory_space<vmem>>, %arg10: memref<4x1xf32, #tpu.memory_space<vmem>>) attributes {dimension_semantics = [#tpu.dimension_semantics<parallel>, #tpu.dimension_semantics<arbitrary>], iteration_bounds = array<i64: 2, 2>, scalar_prefetch = 0 : i64, scratch_operands = 2 : i64, tpu.core_type = #tpu.core_type<tc>, window_params = [{transform_indices = @transform_0, window_bounds = array<i64: 1, 4, 128>}, {pipeline_mode = #tpu.pipeline_mode<synchronous>, transform_indices = @transform_1, window_bounds = array<i64: 12, 4>}, {pipeline_mode = #tpu.pipeline_mode<synchronous>, transform_indices = @transform_2, window_bounds = array<i64: 4, 4>}, {pipeline_mode = #tpu.pipeline_mode<synchronous>, transform_indices = @transform_3, window_bounds = array<i64: 12, 1>}, {pipeline_mode = #tpu.pipeline_mode<synchronous>, transform_indices = @transform_4, window_bounds = array<i64: 4, 1>}, {transform_indices = @transform_5, window_bounds = array<i64: 1, 12, 1>}, {transform_indices = @transform_6, window_bounds = array<i64: 1, 4, 1>}]} {
    %c0_i32 = arith.constant 0 : i32
    %0 = arith.cmpi eq, %arg1, %c0_i32 : i32
    %1 = arith.extui %0 : i1 to i32
    %c0_i32_0 = arith.constant 0 : i32
    %2 = arith.cmpi ne, %1, %c0_i32_0 : i32
    scf.if %2 {
      %cst_30 = arith.constant -1.000000e+30 : f32
      %52 = vector.broadcast %cst_30 : f32 to vector<1x1xf32>
      %c0_31 = arith.constant 0 : index
      %c0_32 = arith.constant 0 : index
      %53 = vector.load %arg9[%c0_31, %c0_32] : memref<1x1xf32, #tpu.memory_space<vmem>>, vector<1x1xf32>
      tpu.vector_store %arg9[%c0_31, %c0_32], %52 {strides = array<i32>} : memref<1x1xf32, #tpu.memory_space<vmem>>, vector<1x1xf32>,
      %cst_33 = arith.constant 0.000000e+00 : f32
      %54 = vector.broadcast %cst_33 : f32 to vector<4x1xf32>
      %c0_34 = arith.constant 0 : index
      %c0_35 = arith.constant 0 : index
      %55 = vector.load %arg10[%c0_34, %c0_35] : memref<4x1xf32, #tpu.memory_space<vmem>>, vector<4x1xf32>
      tpu.vector_store %arg10[%c0_34, %c0_35], %54 {strides = array<i32>} : memref<4x1xf32, #tpu.memory_space<vmem>>, vector<4x1xf32>,
    } else {
    }
    %c0 = arith.constant 0 : index
    %c0_1 = arith.constant 0 : index
    %c0_2 = arith.constant 0 : index
    %3 = vector.load %arg2[%c0, %c0_1, %c0_2] : memref<1x4x128xbf16, #tpu.memory_space<vmem>>, vector<1x4x128xbf16>
    %4 = vector.shape_cast %3 : vector<1x4x128xbf16> to vector<4x128xbf16>
    %c0_3 = arith.constant 0 : index
    %c0_4 = arith.constant 0 : index
    %5 = vector.load %arg3[%c0_3, %c0_4] : memref<12x4xbf16, #tpu.memory_space<vmem>>, vector<12x4xbf16>
    %cst = arith.constant dense<0.000000e+00> : vector<12x128xf32>
    %6 = tpu.matmul %5, %4, %cst {dimension_numbers = #tpu.dot_dimension_numbers<[1], [0], [0], [1], [0, 0, 1, 1], [], []>} : vector<12x4xbf16>, vector<4x128xbf16>, vector<12x128xf32> -> vector<12x128xf32>
    %c0_5 = arith.constant 0 : index
    %c0_6 = arith.constant 0 : index
    %7 = vector.load %arg5[%c0_5, %c0_6] : memref<12x1xf32, #tpu.memory_space<vmem>>, vector<12x1xf32>
    %8 = vector.broadcast %7 : vector<12x1xf32> to vector<12x128xf32>
    %9 = arith.addf %6, %8 : vector<12x128xf32>
    %c0_7 = arith.constant 0 : index
    %c0_8 = arith.constant 0 : index
    %10 = vector.load %arg4[%c0_7, %c0_8] : memref<4x4xbf16, #tpu.memory_space<vmem>>, vector<4x4xbf16>
    %cst_9 = arith.constant dense<0.000000e+00> : vector<4x128xf32>
    %11 = tpu.matmul %10, %4, %cst_9 {dimension_numbers = #tpu.dot_dimension_numbers<[1], [0], [0], [1], [0, 0, 1, 1], [], []>} : vector<4x4xbf16>, vector<4x128xbf16>, vector<4x128xf32> -> vector<4x128xf32>
    %c0_10 = arith.constant 0 : index
    %c0_11 = arith.constant 0 : index
    %c0_12 = arith.constant 0 : index
    %12 = vector.load %arg7[%c0_10, %c0_11, %c0_12] : memref<1x12x1xf32, #tpu.memory_space<vmem>>, vector<1x12x1xf32>
    %13 = vector.shape_cast %12 : vector<1x12x1xf32> to vector<12x1xf32>
    %cst_13 = arith.constant 0.000000e+00 : f32
    %14 = vector.broadcast %cst_13 : f32 to vector<12x1xf32>
    %15 = arith.cmpf ogt, %13, %14 : vector<12x1xf32>
    %cst_14 = arith.constant -1.000000e+30 : f32
    %16 = vector.shape_cast %15 : vector<12x1xi1> to vector<12x1xi1>
    %17 = vector.broadcast %16 : vector<12x1xi1> to vector<12x128xi1>
    %18 = vector.broadcast %cst_14 : f32 to vector<12x128xf32>
    %19 = arith.select %17, %9, %18 : vector<12x128xi1>, vector<12x128xf32>
    %cst_15 = arith.constant dense<0xFF800000> : vector<128xf32>
    %20 = vector.multi_reduction <maximumf>, %19, %cst_15 [0] : vector<12x128xf32> to vector<128xf32>
    %21 = vector.shape_cast %20 : vector<128xf32> to vector<1x128xf32>
    %cst_16 = arith.constant dense<0xFF800000> : vector<1xf32>
    %22 = vector.multi_reduction <maximumf>, %21, %cst_16 [1] : vector<1x128xf32> to vector<1xf32>
    %23 = vector.shape_cast %22 : vector<1xf32> to vector<1x1xf32>
    %24 = tpu.iota {dimensions = array<i32: 1>} : vector<1x128xi32>
    %25 = vector.broadcast %23 : vector<1x1xf32> to vector<1x128xf32>
    %26 = arith.cmpf oge, %21, %25 : vector<1x128xf32>
    %c128_i32 = arith.constant 128 : i32
    %27 = vector.broadcast %c128_i32 : i32 to vector<1x128xi32>
    %28 = arith.select %26, %24, %27 : vector<1x128xi1>, vector<1x128xi32>
    %cst_17 = arith.constant dense<2147483647> : vector<1xi32>
    %29 = vector.multi_reduction <minsi>, %28, %cst_17 [1] : vector<1x128xi32> to vector<1xi32>
    %30 = vector.shape_cast %29 : vector<1xi32> to vector<1x1xi32>
    %31 = vector.broadcast %30 : vector<1x1xi32> to vector<1x128xi32>
    %32 = arith.cmpi eq, %24, %31 : vector<1x128xi32>
    %33 = arith.extui %32 : vector<1x128xi1> to vector<1x128xi32>
    %34 = arith.sitofp %33 : vector<1x128xi32> to vector<1x128xf32>
    %35 = vector.broadcast %34 : vector<1x128xf32> to vector<4x128xf32>
    %36 = arith.mulf %11, %35 : vector<4x128xf32>
    %cst_18 = arith.constant dense<0.000000e+00> : vector<4xf32>
    %37 = vector.multi_reduction <add>, %36, %cst_18 [1] : vector<4x128xf32> to vector<4xf32>
    %38 = vector.shape_cast %37 : vector<4xf32> to vector<4x1xf32>
    %c0_19 = arith.constant 0 : index
    %c0_20 = arith.constant 0 : index
    %39 = vector.load %arg9[%c0_19, %c0_20] : memref<1x1xf32, #tpu.memory_space<vmem>>, vector<1x1xf32>
    %40 = arith.cmpf ogt, %23, %39 : vector<1x1xf32>
    %c0_21 = arith.constant 0 : index
    %c0_22 = arith.constant 0 : index
    %41 = vector.load %arg9[%c0_21, %c0_22] : memref<1x1xf32, #tpu.memory_space<vmem>>, vector<1x1xf32>
    %42 = arith.select %40, %23, %41 : vector<1x1xi1>, vector<1x1xf32>
    %c0_23 = arith.constant 0 : index
    %c0_24 = arith.constant 0 : index
    %43 = vector.load %arg9[%c0_23, %c0_24] : memref<1x1xf32, #tpu.memory_space<vmem>>, vector<1x1xf32>
    tpu.vector_store %arg9[%c0_23, %c0_24], %42 {strides = array<i32>} : memref<1x1xf32, #tpu.memory_space<vmem>>, vector<1x1xf32>,
    %c0_25 = arith.constant 0 : index
    %c0_26 = arith.constant 0 : index
    %44 = vector.load %arg10[%c0_25, %c0_26] : memref<4x1xf32, #tpu.memory_space<vmem>>, vector<4x1xf32>
    %45 = vector.shape_cast %40 : vector<1x1xi1> to vector<1x1xi1>
    %46 = vector.broadcast %45 : vector<1x1xi1> to vector<4x1xi1>
    %47 = arith.select %46, %38, %44 : vector<4x1xi1>, vector<4x1xf32>
    %c0_27 = arith.constant 0 : index
    %c0_28 = arith.constant 0 : index
    %48 = vector.load %arg10[%c0_27, %c0_28] : memref<4x1xf32, #tpu.memory_space<vmem>>, vector<4x1xf32>
    tpu.vector_store %arg10[%c0_27, %c0_28], %47 {strides = array<i32>} : memref<4x1xf32, #tpu.memory_space<vmem>>, vector<4x1xf32>,
    %c1_i32 = arith.constant 1 : i32
    %49 = arith.cmpi eq, %arg1, %c1_i32 : i32
    %50 = arith.extui %49 : i1 to i32
    %c0_i32_29 = arith.constant 0 : i32
    %51 = arith.cmpi ne, %50, %c0_i32_29 : i32
    scf.if %51 {
      %c0_30 = arith.constant 0 : index
      %c0_31 = arith.constant 0 : index
      %52 = vector.load %arg10[%c0_30, %c0_31] : memref<4x1xf32, #tpu.memory_space<vmem>>, vector<4x1xf32>
      %c0_32 = arith.constant 0 : index
      %c0_33 = arith.constant 0 : index
      %53 = vector.load %arg6[%c0_32, %c0_33] : memref<4x1xf32, #tpu.memory_space<vmem>>, vector<4x1xf32>
      %54 = arith.addf %52, %53 : vector<4x1xf32>
      %55 = vector.shape_cast %54 : vector<4x1xf32> to vector<1x4x1xf32>
      %c0_34 = arith.constant 0 : index
      %c0_35 = arith.constant 0 : index
      %c0_36 = arith.constant 0 : index
      %56 = vector.load %arg8[%c0_34, %c0_35, %c0_36] : memref<1x4x1xf32, #tpu.memory_space<vmem>>, vector<1x4x1xf32>
      tpu.vector_store %arg8[%c0_34, %c0_35, %c0_36], %55 {strides = array<i32>} : memref<1x4x1xf32, #tpu.memory_space<vmem>>, vector<1x4x1xf32>,
    } else {
    }
    return
  }
  func.func @transform_0(%arg0: i32, %arg1: i32) -> (i32, i32, i32) {
    %c0_i32 = arith.constant 0 : i32
    %c0_i32_0 = arith.constant 0 : i32
    return %arg0, %c0_i32, %arg1 : i32, i32, i32
  }
  func.func @transform_1(%arg0: i32, %arg1: i32) -> (i32, i32) {
    %c0_i32 = arith.constant 0 : i32
    %c0_i32_0 = arith.constant 0 : i32
    %c0_i32_1 = arith.constant 0 : i32
    return %c0_i32, %c0_i32_0 : i32, i32
  }
  func.func @transform_2(%arg0: i32, %arg1: i32) -> (i32, i32) {
    %c0_i32 = arith.constant 0 : i32
    %c0_i32_0 = arith.constant 0 : i32
    %c0_i32_1 = arith.constant 0 : i32
    return %c0_i32, %c0_i32_0 : i32, i32
  }
  func.func @transform_3(%arg0: i32, %arg1: i32) -> (i32, i32) {
    %c0_i32 = arith.constant 0 : i32
    %c0_i32_0 = arith.constant 0 : i32
    %c0_i32_1 = arith.constant 0 : i32
    return %c0_i32, %c0_i32_0 : i32, i32
  }
  func.func @transform_4(%arg0: i32, %arg1: i32) -> (i32, i32) {
    %c0_i32 = arith.constant 0 : i32
    %c0_i32_0 = arith.constant 0 : i32
    %c0_i32_1 = arith.constant 0 : i32
    return %c0_i32, %c0_i32_0 : i32, i32
  }
  func.func @transform_5(%arg0: i32, %arg1: i32) -> (i32, i32, i32) {
    %c0_i32 = arith.constant 0 : i32
    %c0_i32_0 = arith.constant 0 : i32
    %c0_i32_1 = arith.constant 0 : i32
    return %arg0, %c0_i32, %c0_i32_0 : i32, i32, i32
  }
  func.func @transform_6(%arg0: i32, %arg1: i32) -> (i32, i32, i32) {
    %c0_i32 = arith.constant 0 : i32
    %c0_i32_0 = arith.constant 0 : i32
    %c0_i32_1 = arith.constant 0 : i32
    return %arg0, %c0_i32, %c0_i32_0 : i32, i32, i32
  }
}

</mosaic_0001>

<llo_original>
// kernel: tpu_custom_call.1
$region0: #{tpu_custom_call.1}
  #allocation0 [shape = 'u32[]', space=smem, size = 0x4, offset = 0x4, fixed_abs, tag = 'smem constant byte address 0x4 - core index']
  #allocation1 [shape = 'u32[144,128]{1,0:T(1,128)}', space=vmem, size = 0x12000, scoped, tag = 'internal scratch']
  #allocation2 [shape = 'f32[1,1]{1,0:T(1,128)}', space=vmem, size = 0x200, scoped, tag = 'scratch operand']
  #allocation3 [shape = 'f32[4,1]{1,0:T(4,128)}', space=vmem, size = 0x800, scoped, tag = 'scratch operand']
  %s0 = inlined_call_operand.vmem [shape: bf16[2,4,256], index: 0, kind: input, shape index: {}]
  %s1 = inlined_call_operand.vmem [shape: bf16[12,4], index: 1, kind: input, shape index: {}]
  %s2 = inlined_call_operand.vmem [shape: bf16[4,4], index: 2, kind: input, shape index: {}]
  %s3 = inlined_call_operand.vmem [shape: f32[12,1], index: 3, kind: input, shape index: {}]
  %s4 = inlined_call_operand.vmem [shape: f32[4,1], index: 4, kind: input, shape index: {}]
  %s5 = inlined_call_operand.vmem [shape: f32[2,12,1], index: 5, kind: input, shape index: {}]
  %s6 = inlined_call_operand.vmem [shape: f32[2,4,1], index: 6, kind: output, shape index: {}]
  %s7 = sld [smem:[#allocation0]]
  $region65: #{tpu_custom_call.1} parent=0
    _
  %s9 = ssub.s32 1, %s7
  %s10 = scalar_select 0, %s9, %s7
  loop: start=0, step=1, limit=6
  $region2: #{tpu_custom_call.1} parent=0 // loop_pre_header
    _
  $region3: #{tpu_custom_call.1} parent=0 // loop_header
    %s12 = sphi 0, %s16
    %p13 = scmp.ge.s32.totalorder %s12, 6
    %s19 = sphi 0, %s31
    %s20 = sphi 0, %s27
    %s21 = sphi 0, %s19
    %s22 = sphi 0, %s20
    %s23 = sphi 0, %s21
    %s24 = sphi 0, %s22
    %s36 = sphi 0, %s38
    %s39 = sphi 0, %s36
    %s40 = sphi 0, %s39
    %s56 = sphi 0, %s40
    %s60 = sphi 0, %s60
    %s62 = sphi 0, %s60
    %s63 = sphi 0, %s62
    %s77 = sphi 0, %s63
    %s81 = sphi 0, %s81
    %s83 = sphi 0, %s81
    %s84 = sphi 0, %s83
    %s98 = sphi 0, %s84
    %s102 = sphi 0, %s102
    %s104 = sphi 0, %s102
    %s105 = sphi 0, %s104
    %s119 = sphi 0, %s105
    %s123 = sphi 0, %s123
    %s125 = sphi 0, %s123
    %s126 = sphi 0, %s125
    %s140 = sphi 0, %s126
    %s146 = sphi 0, %s148
    %s149 = sphi 0, %s146
    %s150 = sphi 0, %s149
    %s166 = sphi 0, %s150
    %s172 = sphi 0, %s174
    %s175 = sphi 0, %s172
    %s176 = sphi 0, %s175
    %s192 = sphi 0, %s176
  $region4: #{tpu_custom_call.1} parent=0 // loop_header_branch
    %15 = sbr.rel (%p13) target = $region8
  $region5: #{tpu_custom_call.1} parent=0 // loop_body
    %s17 = ssub.s32 %s12, 1
    %s18 = ssub.s32 %s12, 2
    %s25 = sadd.s32 1, %s20
    %p26 = scmp.ge.s32.totalorder %s25, 2
    %s27 = scalar_select %p26, 0, %s25
    %s28 = sadd.s32 1, %s19
    %s29 = scalar_select %p26, %s28, %s19
    %p30 = scmp.ge.s32.totalorder %s29, 2
    %s31 = scalar_select %p30, 0, %s29
    %s32 = ssub.s32 %s19, %s31
    %s33 = ssub.s32 %s20, %s27
    %s34 = sor.u32 %s32, %s33
    %p35 = scmp.eq.s32.totalorder %s34, 0
    %s37 = sadd.s32 %s36, 1
    %s38 = scalar_select %p35, %s36, %s37
    %p41 = pneg %p35
    %p42 = scmp.eq.s32.totalorder %s12, 3
    %p43 = por %p41, %p42
    %p44 = scmp.ne.s32.totalorder %s36, %s39
    %p45 = scmp.eq.s32.totalorder %s12, 0
    %p46 = por %p44, %p45
    %p47 = scmp.ne.s32.totalorder %s36, %s39
    %p48 = scmp.eq.s32.totalorder %s17, 3
    %p49 = por %p47, %p48
    %p50 = scmp.ne.s32.totalorder %s39, %s40
    %p51 = scmp.eq.s32.totalorder %s17, 0
    %p52 = por %p50, %p51
    %p53 = scmp.ne.s32.totalorder %s39, %s40
    %p54 = scmp.eq.s32.totalorder %s18, 3
    %p55 = por %p53, %p54
    %p57 = scmp.ne.s32.totalorder %s40, %s56
    %p58 = scmp.eq.s32.totalorder %s18, 0
    %p59 = por %p57, %p58
    %s61 = sadd.s32 %s60, 1
    %p64 = scmp.eq.s32.totalorder %s12, 3
    %p65 = scmp.ne.s32.totalorder %s60, %s62
    %p66 = scmp.eq.s32.totalorder %s12, 0
    %p67 = por %p65, %p66
    %p68 = scmp.ne.s32.totalorder %s60, %s62
    %p69 = scmp.eq.s32.totalorder %s17, 3
    %p70 = por %p68, %p69
    %p71 = scmp.ne.s32.totalorder %s62, %s63
    %p72 = scmp.eq.s32.totalorder %s17, 0
    %p73 = por %p71, %p72
    %p74 = scmp.ne.s32.totalorder %s62, %s63
    %p75 = scmp.eq.s32.totalorder %s18, 3
    %p76 = por %p74, %p75
    %p78 = scmp.ne.s32.totalorder %s63, %s77
    %p79 = scmp.eq.s32.totalorder %s18, 0
    %p80 = por %p78, %p79
    %s82 = sadd.s32 %s81, 1
    %p85 = scmp.eq.s32.totalorder %s12, 3
    %p86 = scmp.ne.s32.totalorder %s81, %s83
    %p87 = scmp.eq.s32.totalorder %s12, 0
    %p88 = por %p86, %p87
    %p89 = scmp.ne.s32.totalorder %s81, %s83
    %p90 = scmp.eq.s32.totalorder %s17, 3
    %p91 = por %p89, %p90
    %p92 = scmp.ne.s32.totalorder %s83, %s84
    %p93 = scmp.eq.s32.totalorder %s17, 0
    %p94 = por %p92, %p93
    %p95 = scmp.ne.s32.totalorder %s83, %s84
    %p96 = scmp.eq.s32.totalorder %s18, 3
    %p97 = por %p95, %p96
    %p99 = scmp.ne.s32.totalorder %s84, %s98
    %p100 = scmp.eq.s32.totalorder %s18, 0
    %p101 = por %p99, %p100
    %s103 = sadd.s32 %s102, 1
    %p106 = scmp.eq.s32.totalorder %s12, 3
    %p107 = scmp.ne.s32.totalorder %s102, %s104
    %p108 = scmp.eq.s32.totalorder %s12, 0
    %p109 = por %p107, %p108
    %p110 = scmp.ne.s32.totalorder %s102, %s104
    %p111 = scmp.eq.s32.totalorder %s17, 3
    %p112 = por %p110, %p111
    %p113 = scmp.ne.s32.totalorder %s104, %s105
    %p114 = scmp.eq.s32.totalorder %s17, 0
    %p115 = por %p113, %p114
    %p116 = scmp.ne.s32.totalorder %s104, %s105
    %p117 = scmp.eq.s32.totalorder %s18, 3
    %p118 = por %p116, %p117
    %p120 = scmp.ne.s32.totalorder %s105, %s119
    %p121 = scmp.eq.s32.totalorder %s18, 0
    %p122 = por %p120, %p121
    %s124 = sadd.s32 %s123, 1
    %p127 = scmp.eq.s32.totalorder %s12, 3
    %p128 = scmp.ne.s32.totalorder %s123, %s125
    %p129 = scmp.eq.s32.totalorder %s12, 0
    %p130 = por %p128, %p129
    %p131 = scmp.ne.s32.totalorder %s123, %s125
    %p132 = scmp.eq.s32.totalorder %s17, 3
    %p133 = por %p131, %p132
    %p134 = scmp.ne.s32.totalorder %s125, %s126
    %p135 = scmp.eq.s32.totalorder %s17, 0
    %p136 = por %p134, %p135
    %p137 = scmp.ne.s32.totalorder %s125, %s126
    %p138 = scmp.eq.s32.totalorder %s18, 3
    %p139 = por %p137, %p138
    %p141 = scmp.ne.s32.totalorder %s126, %s140
    %p142 = scmp.eq.s32.totalorder %s18, 0
    %p143 = por %p141, %p142
    %s144 = ssub.s32 %s19, %s31
    %p145 = scmp.eq.s32.totalorder %s144, 0
    %s147 = sadd.s32 %s146, 1
    %s148 = scalar_select %p145, %s146, %s147
    %p151 = pneg %p145
    %p152 = scmp.eq.s32.totalorder %s12, 3
    %p153 = por %p151, %p152
    %p154 = scmp.ne.s32.totalorder %s146, %s149
    %p155 = scmp.eq.s32.totalorder %s12, 0
    %p156 = por %p154, %p155
    %p157 = scmp.ne.s32.totalorder %s146, %s149
    %p158 = scmp.eq.s32.totalorder %s17, 3
    %p159 = por %p157, %p158
    %p160 = scmp.ne.s32.totalorder %s149, %s150
    %p161 = scmp.eq.s32.totalorder %s17, 0
    %p162 = por %p160, %p161
    %p163 = scmp.ne.s32.totalorder %s149, %s150
    %p164 = scmp.eq.s32.totalorder %s18, 3
    %p165 = por %p163, %p164
    %p167 = scmp.ne.s32.totalorder %s150, %s166
    %p168 = scmp.eq.s32.totalorder %s18, 0
    %p169 = por %p167, %p168
    %s170 = ssub.s32 %s19, %s31
    %p171 = scmp.eq.s32.totalorder %s170, 0
    %s173 = sadd.s32 %s172, 1
    %s174 = scalar_select %p171, %s172, %s173
    %p177 = pneg %p171
    %p178 = scmp.eq.s32.totalorder %s12, 3
    %p179 = por %p177, %p178
    %p180 = scmp.ne.s32.totalorder %s172, %s175
    %p181 = scmp.eq.s32.totalorder %s12, 0
    %p182 = por %p180, %p181
    %p183 = scmp.ne.s32.totalorder %s172, %s175
    %p184 = scmp.eq.s32.totalorder %s17, 3
    %p185 = por %p183, %p184
    %p186 = scmp.ne.s32.totalorder %s175, %s176
    %p187 = scmp.eq.s32.totalorder %s17, 0
    %p188 = por %p186, %p187
    %p189 = scmp.ne.s32.totalorder %s175, %s176
    %p190 = scmp.eq.s32.totalorder %s18, 3
    %p191 = por %p189, %p190
    %p193 = scmp.ne.s32.totalorder %s176, %s192
    %p194 = scmp.eq.s32.totalorder %s18, 0
    %p195 = por %p193, %p194
    %p196 = scmp.le.s32.totalorder 1, %s12
    %p197 = scmp.lt.s32.totalorder %s12, 5
    %p198 = pnand %p196, %p197
    %p199 = pneg %p198
    // Predicated region
    $region9: #{tpu_custom_call.1} parent=5 // pred_check
      _
    $region10: #{tpu_custom_call.1} parent=5 // pred_check_branch
      %201 = sbr.rel (%p198) target = $region12
    $region11: #{tpu_custom_call.1} parent=5 // pred_region
      %s202 = ssub.s32 %s12, 1
      // Predicated region
      $region13: #{tpu_custom_call.1} parent=11 // pred_check
        %p203 = pneg %p73
      $region14: #{tpu_custom_call.1} parent=11 // pred_check_branch
        %205 = sbr.rel (%p203) target = $region16
      $region15: #{tpu_custom_call.1} parent=11 // pred_region
        _
      $region16: #{tpu_custom_call.1} parent=11 // pred_fallthru
        _
      // Predicated region
      $region17: #{tpu_custom_call.1} parent=11 // pred_check
        %p206 = pneg %p94
      $region18: #{tpu_custom_call.1} parent=11 // pred_check_branch
        %208 = sbr.rel (%p206) target = $region20
      $region19: #{tpu_custom_call.1} parent=11 // pred_region
        _
      $region20: #{tpu_custom_call.1} parent=11 // pred_fallthru
        _
      // Predicated region
      $region21: #{tpu_custom_call.1} parent=11 // pred_check
        %p209 = pneg %p115
      $region22: #{tpu_custom_call.1} parent=11 // pred_check_branch
        %211 = sbr.rel (%p209) target = $region24
      $region23: #{tpu_custom_call.1} parent=11 // pred_region
        _
      $region24: #{tpu_custom_call.1} parent=11 // pred_fallthru
        _
      // Predicated region
      $region25: #{tpu_custom_call.1} parent=11 // pred_check
        %p212 = pneg %p136
      $region26: #{tpu_custom_call.1} parent=11 // pred_check_branch
        %214 = sbr.rel (%p212) target = $region28
      $region27: #{tpu_custom_call.1} parent=11 // pred_region
        _
      $region28: #{tpu_custom_call.1} parent=11 // pred_fallthru
        _
    $region12: #{tpu_custom_call.1} parent=5 // pred_fallthru
      _
    %p215 = scmp.lt.s32.totalorder %s12, 4
    // Predicated region
    $region29: #{tpu_custom_call.1} parent=5 // pred_check
      %p216 = pneg %p215
    $region30: #{tpu_custom_call.1} parent=5 // pred_check_branch
      %218 = sbr.rel (%p216) target = $region32
    $region31: #{tpu_custom_call.1} parent=5 // pred_region
      // Predicated region
      $region33: #{tpu_custom_call.1} parent=31 // pred_check
        %p219 = pneg %p46
      $region34: #{tpu_custom_call.1} parent=31 // pred_check_branch
        %221 = sbr.rel (%p219) target = $region36
      $region35: #{tpu_custom_call.1} parent=31 // pred_region
        %p222 = scmp.lt.s32.totalorder %s19, 1
        %s223 = scalar_select %p222, %s19, 1
        %p224 = scmp.lt.s32.totalorder %s20, 1
        %s225 = scalar_select %p224, %s20, 1
        %s226 = smul.addr %s223, 2
        %s227 = sadd.s32 %s225, %s226
        %s228 = smul.addr %s227, 2
        %s229 = scalar_lea.vmem %s0, %s228
      $region36: #{tpu_custom_call.1} parent=31 // pred_fallthru
        _
      // Predicated region
      $region37: #{tpu_custom_call.1} parent=31 // pred_check
        %p230 = pneg %p156
      $region38: #{tpu_custom_call.1} parent=31 // pred_check_branch
        %232 = sbr.rel (%p230) target = $region40
      $region39: #{tpu_custom_call.1} parent=31 // pred_region
        %p233 = scmp.lt.s32.totalorder %s19, 1
        %s234 = scalar_select %p233, %s19, 1
        %s235 = smul.addr %s234, 2
        %s236 = smul.addr %s235, 8
        %s237 = scalar_lea.vmem %s5, %s236
      $region40: #{tpu_custom_call.1} parent=31 // pred_fallthru
        _
    $region32: #{tpu_custom_call.1} parent=5 // pred_fallthru
      _
    %p238 = scmp.le.s32.totalorder 1, %s12
    %p239 = scmp.lt.s32.totalorder %s12, 5
    %p240 = pnand %p238, %p239
    %p241 = pneg %p240
    // Predicated region
    $region41: #{tpu_custom_call.1} parent=5 // pred_check
      _
    $region42: #{tpu_custom_call.1} parent=5 // pred_check_branch
      %243 = sbr.rel (%p240) target = $region44
    $region43: #{tpu_custom_call.1} parent=5 // pred_region
      %s244 = ssub.s32 %s12, 1
      %p245 = scmp.lt.s32.totalorder %s21, 1
      %s246 = scalar_select %p245, %s21, 1
      %p247 = scmp.lt.s32.totalorder %s22, 1
      %s248 = scalar_select %p247, %s22, 1
      %s249 = smul.addr %s246, 2
      %s250 = sadd.s32 %s248, %s249
      %s251 = smul.addr %s250, 2
      %s252 = scalar_lea.vmem %s0, %s251
      %p253 = pneg %p52
      %p254 = pneg %p49
      %p255 = pneg %p73
      %p256 = pneg %p70
      %p257 = pneg %p94
      %p258 = pneg %p91
      %p259 = pneg %p115
      %p260 = pneg %p112
      %p261 = pneg %p136
      %p262 = pneg %p133
      %p263 = scmp.lt.s32.totalorder %s21, 1
      %s264 = scalar_select %p263, %s21, 1
      %s265 = smul.addr %s264, 2
      %s266 = smul.addr %s265, 8
      %s267 = scalar_lea.vmem %s5, %s266
      %p268 = pneg %p162
      %p269 = pneg %p159
      %p270 = pneg %p188
      %p271 = pneg %p185
      %p272 = scmp.lt.s32.totalorder %s21, 1
      %s273 = scalar_select %p272, %s21, 1
      %s274 = smul.addr %s273, 4
      %s275 = scalar_lea.vmem %s6, %s274
      %p276 = scmp.lt.s32.totalorder %s21, 1
      %s277 = scalar_select %p276, %s21, 1
      %p278 = scmp.lt.s32.totalorder %s22, 1
      %s279 = scalar_select %p278, %s22, 1
      %s280 = smul.addr %s277, 2
      %s281 = sadd.s32 %s279, %s280
      %s282 = smul.addr %s281, 2
      %s283 = scalar_lea.vmem %s0, %s282
      %p284 = scmp.lt.s32.totalorder %s21, 1
      %s285 = scalar_select %p284, %s21, 1
      %s286 = smul.addr %s285, 2
      %s287 = smul.addr %s286, 8
      %s288 = scalar_lea.vmem %s5, %s287
      %p289 = scmp.lt.s32.totalorder %s21, 1
      %s290 = scalar_select %p289, %s21, 1
      %s291 = smul.addr %s290, 4
      %s292 = scalar_lea.vmem %s6, %s291
      %p294 = scmp.eq.s32.totalorder %s22, 0
      // Predicated region
      $region45: #{tpu_custom_call.1} parent=43 // pred_check
        %p295 = pneg %p294
      $region46: #{tpu_custom_call.1} parent=43 // pred_check_branch
        %297 = sbr.rel (%p295) target = $region48
      $region47: #{tpu_custom_call.1} parent=43 // pred_region
        %vm298 = vcmask 0
        %299 = vst.msk [vmem:[#allocation2] sm:$0x1] %vm298, -1e+30
        %vm300 = vcmask 3072
        %301 = vst.msk [vmem:[#allocation3] sm:$0xf] %vm300, 0.0
      $region48: #{tpu_custom_call.1} parent=43 // pred_fallthru
        _
      %v302 = vld [vmem:[%s283] sm:$0x3]
      %v303 = vld [vmem:[%s1] sm:$0xf]
      %v304 = vld [vmem:[%s1 + $0x4] sm:$0x3]
      %v305 = vld [vmem:[%s3] sm:$0xff]
      %v306 = vld [vmem:[%s3 + $0x8] sm:$0xf]
      %308 = vset.pattern.permute.xlu0 0
      %309 = vperm.xlu0 %308, %v305
      %v310 = vpop.permute.xlu0 %309
      %313 = vset.pattern.permute.xlu0 0
      %314 = vperm.xlu0 %313, %v306
      %v315 = vpop.permute.xlu0 %314
      %v319 = vunpack.c.l.b16 %v303
      %v320 = vunpack.c.l.b16 %v304
      %v321 = vpack.c.b16 %v320, %v319
      %vm322 = vcmask 31744
      %v324 = vsel %vm322, %v321, 0
      %vm326 = vcmask 1041408
      %v328 = vsel %vm326, %v302, 0
      %330 = vmatprep.subr.bf16.mxu0 0
      %331 = vmatpush1.bf16.msra.mxu0 %v328
      %332 = vmatprep.subr.bf16.mxu0 0
      %333 = vmatpush1.bf16.msra.mxu0 0
      %334 = vmatprep.subr.bf16.mxu0 0
      %335 = vmatpush1.bf16.msra.mxu0 0
      %336 = vmatprep.subr.bf16.mxu0 0
      %337 = vmatpush1.bf16.msra.mxu0 0
      %338 = vmatprep.subr.bf16.mxu0 0
      %339 = vmatpush1.bf16.msra.mxu0 0
      %340 = vmatprep.subr.bf16.mxu0 0
      %341 = vmatpush1.bf16.msra.mxu0 0
      %342 = vmatprep.subr.bf16.mxu0 0
      %343 = vmatpush1.bf16.msra.mxu0 0
      %344 = vmatprep.subr.bf16.mxu0 0
      %345 = vmatpush1.bf16.msra.mxu0 0
      %346 = vmatprep.subr.bf16.mxu0 0
      %347 = vmatpush1.bf16.msra.mxu0 0
      %348 = vmatprep.subr.bf16.mxu0 0
      %349 = vmatpush1.bf16.msra.mxu0 0
      %350 = vmatprep.subr.bf16.mxu0 0
      %351 = vmatpush1.bf16.msra.mxu0 0
      %352 = vmatprep.subr.bf16.mxu0 0
      %353 = vmatpush1.bf16.msra.mxu0 0
      %354 = vmatprep.subr.bf16.mxu0 0
      %355 = vmatpush1.bf16.msra.mxu0 0
      %356 = vmatprep.subr.bf16.mxu0 0
      %357 = vmatpush1.bf16.msra.mxu0 0
      %358 = vmatprep.subr.bf16.mxu0 0
      %359 = vmatpush1.bf16.msra.mxu0 0
      %360 = vmatprep.subr.bf16.mxu0 0
      %361 = vmatpush1.bf16.msra.mxu0 0
      %362 = vmatprep.mubr.bf16.mxu0 0
      %363 = vmatmul.mubr.bf16.gmra.mrb[0].mxu0 %v324
      %v364 = vpop.f32.mrb[0].mxu0
      %v365 = vadd.f32 %v310, %v364
      %v366 = vpop.f32.mrb[0].mxu0
      %v367 = vpop.f32.mrb[0].mxu0
      %v368 = vadd.f32 %v315, %v367
      %v369 = vpop.f32.mrb[0].mxu0
      %370 = vdwg.mxu0
      %v371 = vld [vmem:[%s2] sm:$0x3]
      %v373 = vsel %vm322, %v371, 0
      %375 = vmatprep.subr.bf16.mxu0 0
      %376 = vmatpush1.bf16.msra.mxu0 %v328
      %377 = vmatprep.subr.bf16.mxu0 0
      %378 = vmatpush1.bf16.msra.mxu0 0
      %379 = vmatprep.subr.bf16.mxu0 0
      %380 = vmatpush1.bf16.msra.mxu0 0
      %381 = vmatprep.subr.bf16.mxu0 0
      %382 = vmatpush1.bf16.msra.mxu0 0
      %383 = vmatprep.subr.bf16.mxu0 0
      %384 = vmatpush1.bf16.msra.mxu0 0
      %385 = vmatprep.subr.bf16.mxu0 0
      %386 = vmatpush1.bf16.msra.mxu0 0
      %387 = vmatprep.subr.bf16.mxu0 0
      %388 = vmatpush1.bf16.msra.mxu0 0
      %389 = vmatprep.subr.bf16.mxu0 0
      %390 = vmatpush1.bf16.msra.mxu0 0
      %391 = vmatprep.subr.bf16.mxu0 0
      %392 = vmatpush1.bf16.msra.mxu0 0
      %393 = vmatprep.subr.bf16.mxu0 0
      %394 = vmatpush1.bf16.msra.mxu0 0
      %395 = vmatprep.subr.bf16.mxu0 0
      %396 = vmatpush1.bf16.msra.mxu0 0
      %397 = vmatprep.subr.bf16.mxu0 0
      %398 = vmatpush1.bf16.msra.mxu0 0
      %399 = vmatprep.subr.bf16.mxu0 0
      %400 = vmatpush1.bf16.msra.mxu0 0
      %401 = vmatprep.subr.bf16.mxu0 0
      %402 = vmatpush1.bf16.msra.mxu0 0
      %403 = vmatprep.subr.bf16.mxu0 0
      %404 = vmatpush1.bf16.msra.mxu0 0
      %405 = vmatprep.subr.bf16.mxu0 0
      %406 = vmatpush1.bf16.msra.mxu0 0
      %407 = vmatprep.mubr.bf16.mxu0 0
      %408 = vmatmul.mubr.bf16.gmra.mrb[0].mxu0 %v373
      %v409 = vpop.f32.mrb[0].mxu0
      %v410 = vadd.f32 0.0, %v409
      %v411 = vpop.f32.mrb[0].mxu0
      %v412 = vpop.f32.mrb[0].mxu0
      %v413 = vpop.f32.mrb[0].mxu0
      %414 = vdwg.mxu0
      %v415 = vld [vmem:[%s288] sm:$0xff]
      %v416 = vld [vmem:[%s288 + $0x8] sm:$0xf]
      %vm417 = vcmp.gt.f32.partialorder %v415, 0.0
      %vm418 = vcmp.gt.f32.partialorder %v416, 0.0
      %v419 = vsel %vm417, 1, 0
      %v420 = vsel %vm418, 1, 0
      %421 = vset.pattern.permute.xlu0 0
      %422 = vperm.xlu0 %421, %v419
      %v423 = vpop.permute.xlu0 %422
      %424 = vset.pattern.permute.xlu0 0
      %425 = vperm.xlu0 %424, %v420
      %v426 = vpop.permute.xlu0 %425
      %vm427 = vcmp.eq.s32.totalorder %v423, 1
      %vm428 = vcmp.eq.s32.totalorder %v426, 1
      %v429 = vsel %vm427, %v365, -1e+30
      %v430 = vsel %vm428, %v368, -1e+30
      %vm431 = vcmask 1043456
      %v432 = vsel %vm431, %v430, -inf
      %v433 = vmax.f32 %v429, %v432
      %v434 = vrot.slane %v433, 4
      %v435 = vmax.f32 %v433, %v434
      %v436 = vrot.slane %v435, 2
      %v437 = vmax.f32 %v435, %v436
      %v438 = vrot.slane %v437, 1
      %v439 = vmax.f32 %v437, %v438
      %440 = vmax.xlane.f32.xlu0 %v439
      %v441 = vpop.xlane.xlu0 %440
      %v442 = vlaneseq
      %v443 = vand.u32 %v442, 127
      %vm444 = vcmp.ge.f32.partialorder %v439, %v441
      %v445 = vsel %vm444, %v443, 128
      %v446 = vand.u32 %v445, 65535
      %v447 = vshra.s32 %v445, 16
      %v448 = vcvt.s32.f32 %v446
      %v449 = vcvt.s32.f32 %v447
      %450 = vmin.xlane.f32.xlu0 %v449
      %v451 = vpop.xlane.xlu0 %450
      %vm452 = vcmp.eq.f32.partialorder %v449, %v451
      %v453 = vsel %vm452, %v448, inf
      %454 = vmin.xlane.f32.xlu0 %v453
      %v455 = vpop.xlane.xlu0 %454
      %v456 = vcvt.f32.s32 %v455
      %v457 = vcvt.f32.s32 %v451
      %v458 = vshll.u32 %v457, 16
      %v459 = vadd.s32 %v458, %v456
      %vm460 = vcmp.eq.s32.totalorder %v443, %v459
      %v461 = vsel %vm460, 1, 0
      %v462 = vcvt.s32.f32 %v461
      %v463 = vmul.f32 %v410, %v462
      %v464 = vsel %vm431, %v463, 0.0
      %465 = vadd.xlane.f32.xlu0 %v464
      %v466 = vpop.xlane.xlu0 %465
      %v467 = vld [vmem:[#allocation2] sm:$0x1]
      %vm468 = vcmp.gt.f32.partialorder %v441, %v467
      %v469 = vsel %vm468, %v441, %v467
      %vm470 = vcmask 0
      %471 = vst.msk [vmem:[#allocation2] sm:$0x1] %vm470, %v469
      %v472 = vld [vmem:[#allocation3] sm:$0xf]
      %v473 = vsel %vm468, 1, 0
      %v474 = vlaneseq
      %v475 = vshrl.u32 %v474, 7
      %v476 = vsub.s32 0, %v475
      %v477 = vrot.slane %v473, %v476
      %vm478 = vcmp.eq.s32.totalorder %v477, 1
      %v479 = vsel %vm478, %v466, %v472
      %vm480 = vcmask 3072
      %481 = vst.msk [vmem:[#allocation3] sm:$0xf] %vm480, %v479
      %p482 = scmp.eq.s32.totalorder %s22, 1
      // Predicated region
      $region49: #{tpu_custom_call.1} parent=43 // pred_check
        %p483 = pneg %p482
      $region50: #{tpu_custom_call.1} parent=43 // pred_check_branch
        %485 = sbr.rel (%p483) target = $region52
      $region51: #{tpu_custom_call.1} parent=43 // pred_region
        %v486 = vld [vmem:[#allocation3] sm:$0xf]
        %v487 = vld [vmem:[%s4] sm:$0xf]
        %v488 = vadd.f32 %v486, %v487
        %489 = vst.msk [vmem:[%s292] sm:$0xf] %vm480, %v488
      $region52: #{tpu_custom_call.1} parent=43 // pred_fallthru
        _
      %p490 = scmp.lt.s32.totalorder %s21, 1
      %s491 = scalar_select %p490, %s21, 1
      %s492 = smul.addr %s491, 4
      %s493 = scalar_lea.vmem %s6, %s492
      // Predicated region
      $region53: #{tpu_custom_call.1} parent=43 // pred_check
        %p494 = pneg %p185
      $region54: #{tpu_custom_call.1} parent=43 // pred_check_branch
        %496 = sbr.rel (%p494) target = $region56
      $region55: #{tpu_custom_call.1} parent=43 // pred_region
        _
      $region56: #{tpu_custom_call.1} parent=43 // pred_fallthru
        _
    $region44: #{tpu_custom_call.1} parent=5 // pred_fallthru
      _
    %p497 = scmp.le.s32.totalorder 2, %s12
    // Predicated region
    $region57: #{tpu_custom_call.1} parent=5 // pred_check
      %p498 = pneg %p497
    $region58: #{tpu_custom_call.1} parent=5 // pred_check_branch
      %500 = sbr.rel (%p498) target = $region60
    $region59: #{tpu_custom_call.1} parent=5 // pred_region
      %s501 = ssub.s32 %s12, 2
      // Predicated region
      $region61: #{tpu_custom_call.1} parent=59 // pred_check
        %p502 = pneg %p191
      $region62: #{tpu_custom_call.1} parent=59 // pred_check_branch
        %504 = sbr.rel (%p502) target = $region64
      $region63: #{tpu_custom_call.1} parent=59 // pred_region
        %p505 = scmp.lt.s32.totalorder %s23, 1
        %s506 = scalar_select %p505, %s23, 1
        %s507 = smul.addr %s506, 4
        %s508 = scalar_lea.vmem %s6, %s507
      $region64: #{tpu_custom_call.1} parent=59 // pred_fallthru
        _
    $region60: #{tpu_custom_call.1} parent=5 // pred_fallthru
      _
  $region6: #{tpu_custom_call.1} parent=0 // loop_footer
    %s16 = sadd.s32 1, %s12
  $region7: #{tpu_custom_call.1} parent=0 // loop_footer_branch
    %11 = sbr.rel target = $region3
  $region8: #{tpu_custom_call.1} parent=0 // loop_exit
    _

</llo_original>
